<compile_context>
chip_gen: v7x
topology: tpu7x:2x2x1
jax: 0.10.0
libtpu: 0.0.40
codegen_flags: <defaults>
</compile_context>

<pallas_src>
import jax
import jax.numpy as jnp
from jax.experimental import pallas as pl
from jax.experimental.pallas import tpu as pltpu


def _round_up(x, m):
    return ((x + m - 1) // m) * m


def _make_mlp_kernel(num_layers, lane, rows_per_layer, use_bf16):
    """Builds the kernel that pushes one batch tile through the whole MLP.

    Refs:
      x_ref: [tile_m, lane]                         activation tile (VMEM)
      p_ref: [num_layers * rows_per_layer, lane]    packed params (VMEM, resident)
      o_ref: [tile_m, lane]                         output tile (VMEM)

    Per-layer slab layout: `lane` weight rows ([in, out], zero-padded),
    then 8 rows whose first row holds the bias (rest zero, keeps each
    layer's block sublane-aligned). All slab offsets are static Python ints.
    """

    def kernel(x_ref, p_ref, o_ref):
        h = x_ref[...].astype(jnp.float32)
        for i in range(num_layers):
            base = i * rows_per_layer
            w = p_ref[base:base + lane, :]               # [lane, lane]
            b = p_ref[base + lane:base + lane + 1, :]    # [1, lane]
            if use_bf16:
                # bf16 MXU operands, f32 accumulation (v6e/v7x fast path).
                acc = jnp.dot(h.astype(jnp.bfloat16), w.astype(jnp.bfloat16),
                              preferred_element_type=jnp.float32)
            else:
                acc = jnp.dot(h, w, preferred_element_type=jnp.float32)
            h = acc + b                       # bias add in f32 (VPU)
            if i < num_layers - 1:
                h = jnp.maximum(h, 0.0)       # F.relu, f32
        o_ref[...] = h.astype(o_ref.dtype)    # lane-dense, unmasked store

    return kernel


def ssn_aux_task_head_forward(feat, weights, biases, *, tile_m=512,
                              use_bf16=False):
    """SSNAuxTaskHead.forward as a single tiled Pallas call.

    Args:
      feat:    [batch, in_feature_dim] float32 latent features.
      weights: list of [in_i, out_i] float32 (transposed from the PyTorch
               nn.Linear [out, in] convention).
      biases:  list of [1, out_i] float32.
      tile_m:  batch tile (rows per grid step). 512 already sits near the
               HBM roofline on v5e; at 128 lanes / f32 that is ~256 KiB per
               activation buffer, so it also fits v7x's smaller
               (64 MiB physical / 32 MiB scoped) VMEM with large headroom.
      use_bf16: feed bf16 operands to the MXU (f32 accumulate). Slightly
               changes numerics; keep False for bit-exact-vs-f32 checks.

    Returns:
      [batch, num_tasks] float32 task scores.
    """
    batch, in_dim = feat.shape
    num_layers = len(weights)
    num_tasks = weights[-1].shape[1]

    # Common lane width: every feature dim zero-padded to a multiple of 128.
    dims = [in_dim] + [w.shape[1] for w in weights]
    lane = _round_up(max(dims), 128)
    rows_per_layer = lane + 8   # lane weight rows + 1 bias row + 7 pad rows

    # Pack all parameters into one zero-padded, lane-dense slab.
    slab = jnp.zeros((num_layers * rows_per_layer, lane), jnp.float32)
    for i, (w, b) in enumerate(zip(weights, biases)):
        base = i * rows_per_layer
        slab = slab.at[base:base + w.shape[0], :w.shape[1]].set(
            w.astype(jnp.float32))
        slab = slab.at[base + lane, :b.shape[-1]].set(
            b.astype(jnp.float32).reshape(-1))

    # Sublane-aligned batch tile; pad batch up to a whole number of tiles.
    tile_m = _round_up(max(int(tile_m), 8), 8)
    tile = min(tile_m, _round_up(batch, 8))
    m_pad = _round_up(batch, tile)
    x = jnp.zeros((m_pad, lane), jnp.float32)
    x = x.at[:batch, :in_dim].set(feat.astype(jnp.float32))

    kernel = _make_mlp_kernel(num_layers, lane, rows_per_layer, use_bf16)
    grid = (m_pad // tile,)

    out_padded = pl.pallas_call(
        kernel,
        out_shape=jax.ShapeDtypeStruct((m_pad, lane), jnp.float32),
        grid=grid,
        in_specs=[
            # Streamed activation tiles (double-buffered by the pipeline).
            pl.BlockSpec((tile, lane), lambda i: (i, 0)),
            # Packed params: constant block index -> DMA'd once, VMEM-resident.
            pl.BlockSpec(slab.shape, lambda i: (0, 0)),
        ],
        out_specs=pl.BlockSpec((tile, lane), lambda i: (i, 0)),
        compiler_params=pltpu.CompilerParams(
            dimension_semantics=("parallel",)),   # v7x: shard tiles over 2 TCs
    )(x, slab)

    # Slice padded batch rows and padded output lanes back off.
    return out_padded[:batch, :num_tasks]


def init_ssn_aux_task_head_params(key, in_feature_dim, num_tasks,
                                  middle_layers, init_std=0.001):
    """Mirrors SSNAuxTaskHead.__init__ + init_weights deterministically.

    nn.Linear(in, out).weight has shape [out, in]; init_weights draws it from
    N(0, init_std) and zeroes the bias. We store the transposed weight
    [in, out] for the kernel's x @ W layout.
    """
    layers = [in_feature_dim] + list(middle_layers) + [num_tasks]
    weights, biases = [], []
    for in_size, out_size in zip(layers[:-1], layers[1:]):
        key, sub = jax.random.split(key)
        w_pt = init_std * jax.random.normal(sub, (out_size, in_size),
                                            dtype=jnp.float32)
        weights.append(w_pt.T)                                 # [in, out]
        biases.append(jnp.zeros((1, out_size), jnp.float32))   # [1, out]
    return weights, biases


def _reference_forward(feat, weights, biases):
    """Pure-JAX reference matching the PyTorch forward exactly."""
    h = feat
    for i, (w, b) in enumerate(zip(weights, biases)):
        h = h @ w + b
        if i < len(weights) - 1:
            h = jnp.maximum(h, 0.0)
    return h


if __name__ == "__main__":
    # Small shapes consistent with the module: latent features per sample.
    in_feature_dim = 32
    middle_layers = [64, 48]
    num_tasks = 16

    key = jax.random.PRNGKey(0)
    key, pkey, xkey, xkey2 = jax.random.split(key, 4)

    weights, biases = init_ssn_aux_task_head_params(
        pkey, in_feature_dim, num_tasks, middle_layers, init_std=0.001)

    # Case 1: small batch, single grid step.
    feat = jax.random.normal(xkey, (8, in_feature_dim), dtype=jnp.float32)
    out = jax.block_until_ready(
        ssn_aux_task_head_forward(feat, weights, biases))
    ref = _reference_forward(feat, weights, biases)
    assert out.shape == (8, num_tasks)
    assert jnp.allclose(out, ref, atol=1e-5, rtol=1e-5), "mismatch (small)"

    # Case 2: batch not a tile multiple -> exercises batch padding + the
    # multi-tile "parallel" grid with the resident parameter slab.
    feat2 = jax.random.normal(xkey2, (260, in_feature_dim), dtype=jnp.float32)
    out2 = jax.block_until_ready(
        ssn_aux_task_head_forward(feat2, weights, biases, tile_m=128))
    ref2 = _reference_forward(feat2, weights, biases)
    assert out2.shape == (260, num_tasks)
    assert jnp.allclose(out2, ref2, atol=1e-5, rtol=1e-5), "mismatch (tiled)"

    print("KERNEL_OK")
</pallas_src>

<mosaic_0001>
module attributes {stable_mosaic.version = 11 : i64} {
  func.func @kernel(%arg0: i32, %arg1: memref<8x128xf32, #tpu.memory_space<vmem>>, %arg2: memref<408x128xf32, #tpu.memory_space<vmem>>, %arg3: memref<8x128xf32, #tpu.memory_space<vmem>>) attributes {dimension_semantics = [#tpu.dimension_semantics<parallel>], iteration_bounds = array<i64: 1>, scalar_prefetch = 0 : i64, scratch_operands = 0 : i64, tpu.core_type = #tpu.core_type<tc>, window_params = [{transform_indices = @transform_0, window_bounds = array<i64: 8, 128>}, {pipeline_mode = #tpu.pipeline_mode<synchronous>, transform_indices = @transform_1, window_bounds = array<i64: 408, 128>}, {transform_indices = @transform_2, window_bounds = array<i64: 8, 128>}]} {
    %c0 = arith.constant 0 : index
    %c0_0 = arith.constant 0 : index
    %0 = vector.load %arg1[%c0, %c0_0] : memref<8x128xf32, #tpu.memory_space<vmem>>, vector<8x128xf32>
    %c0_1 = arith.constant 0 : index
    %c0_2 = arith.constant 0 : index
    %1 = vector.load %arg2[%c0_1, %c0_2] : memref<408x128xf32, #tpu.memory_space<vmem>>, vector<128x128xf32>
    %c128 = arith.constant 128 : index
    %c0_3 = arith.constant 0 : index
    %2 = vector.load %arg2[%c128, %c0_3] : memref<408x128xf32, #tpu.memory_space<vmem>>, vector<1x128xf32>
    %cst = arith.constant dense<0.000000e+00> : vector<8x128xf32>
    %3 = tpu.matmul %0, %1, %cst {dimension_numbers = #tpu.dot_dimension_numbers<[1], [0], [0], [1], [0, 0, 1, 1], [], []>} : vector<8x128xf32>, vector<128x128xf32>, vector<8x128xf32> -> vector<8x128xf32>
    %4 = vector.broadcast %2 : vector<1x128xf32> to vector<8x128xf32>
    %5 = arith.addf %3, %4 : vector<8x128xf32>
    %cst_4 = arith.constant 0.000000e+00 : f32
    %6 = vector.broadcast %cst_4 : f32 to vector<8x128xf32>
    %7 = arith.maximumf %5, %6 : vector<8x128xf32>
    %c136 = arith.constant 136 : index
    %c0_5 = arith.constant 0 : index
    %8 = vector.load %arg2[%c136, %c0_5] : memref<408x128xf32, #tpu.memory_space<vmem>>, vector<128x128xf32>
    %c264 = arith.constant 264 : index
    %c0_6 = arith.constant 0 : index
    %9 = vector.load %arg2[%c264, %c0_6] : memref<408x128xf32, #tpu.memory_space<vmem>>, vector<1x128xf32>
    %cst_7 = arith.constant dense<0.000000e+00> : vector<8x128xf32>
    %10 = tpu.matmul %7, %8, %cst_7 {dimension_numbers = #tpu.dot_dimension_numbers<[1], [0], [0], [1], [0, 0, 1, 1], [], []>} : vector<8x128xf32>, vector<128x128xf32>, vector<8x128xf32> -> vector<8x128xf32>
    %11 = vector.broadcast %9 : vector<1x128xf32> to vector<8x128xf32>
    %12 = arith.addf %10, %11 : vector<8x128xf32>
    %cst_8 = arith.constant 0.000000e+00 : f32
    %13 = vector.broadcast %cst_8 : f32 to vector<8x128xf32>
    %14 = arith.maximumf %12, %13 : vector<8x128xf32>
    %c272 = arith.constant 272 : index
    %c0_9 = arith.constant 0 : index
    %15 = vector.load %arg2[%c272, %c0_9] : memref<408x128xf32, #tpu.memory_space<vmem>>, vector<128x128xf32>
    %c400 = arith.constant 400 : index
    %c0_10 = arith.constant 0 : index
    %16 = vector.load %arg2[%c400, %c0_10] : memref<408x128xf32, #tpu.memory_space<vmem>>, vector<1x128xf32>
    %cst_11 = arith.constant dense<0.000000e+00> : vector<8x128xf32>
    %17 = tpu.matmul %14, %15, %cst_11 {dimension_numbers = #tpu.dot_dimension_numbers<[1], [0], [0], [1], [0, 0, 1, 1], [], []>} : vector<8x128xf32>, vector<128x128xf32>, vector<8x128xf32> -> vector<8x128xf32>
    %18 = vector.broadcast %16 : vector<1x128xf32> to vector<8x128xf32>
    %19 = arith.addf %17, %18 : vector<8x128xf32>
    %c0_12 = arith.constant 0 : index
    %c0_13 = arith.constant 0 : index
    %20 = vector.load %arg3[%c0_12, %c0_13] : memref<8x128xf32, #tpu.memory_space<vmem>>, vector<8x128xf32>
    tpu.vector_store %arg3[%c0_12, %c0_13], %19 {strides = array<i32>} : memref<8x128xf32, #tpu.memory_space<vmem>>, vector<8x128xf32>,
    return
  }
  func.func @transform_0(%arg0: i32) -> (i32, i32) {
    %c0_i32 = arith.constant 0 : i32
    %c0_i32_0 = arith.constant 0 : i32
    return %arg0, %c0_i32 : i32, i32
  }
  func.func @transform_1(%arg0: i32) -> (i32, i32) {
    %c0_i32 = arith.constant 0 : i32
    %c0_i32_0 = arith.constant 0 : i32
    %c0_i32_1 = arith.constant 0 : i32
    return %c0_i32, %c0_i32_0 : i32, i32
  }
  func.func @transform_2(%arg0: i32) -> (i32, i32) {
    %c0_i32 = arith.constant 0 : i32
    %c0_i32_0 = arith.constant 0 : i32
    return %arg0, %c0_i32 : i32, i32
  }
}

</mosaic_0001>

<llo_original>
// kernel: tpu_custom_call.1
$region0: #{tpu_custom_call.1}
  #allocation0 [shape = 'u32[]', space=smem, size = 0x4, offset = 0x4, fixed_abs, tag = 'smem constant byte address 0x4 - core index']
  #allocation1 [shape = 'u32[144,128]{1,0:T(1,128)}', space=vmem, size = 0x12000, scoped, tag = 'internal scratch']
  %s0 = inlined_call_operand.hbm [shape: f32[8,128], index: 0, kind: input, shape index: {}]
  %s1 = inlined_call_operand.hbm [shape: f32[408,128], index: 1, kind: input, shape index: {}]
  %s2 = inlined_call_operand.hbm [shape: f32[8,128], index: 2, kind: output, shape index: {}]
  %s3 = sld [smem:[#allocation0]]
  $region26: #{tpu_custom_call.1} parent=0
    _
  %s5 = ssub.s32 1, %s3
  %s6 = scalar_select 0, %s5, %s3
  $region1: #{tpu_custom_call.1} parent=0
    #allocation2 [shape = 'u8[4096]{0}', space=vmem, size = 0x1000, scoped, tag = 'input window, operand 0, single buffered']
    #allocation3 [shape = 's32[1]{0}', space=sflag, size = 0x4, scoped, tag = 'scoped memory for tpu_custom_call.1']
    #allocation4 [shape = 's32[1]{0}', space=sflag, size = 0x4, scoped, tag = 'scoped memory for tpu_custom_call.1']
    #allocation5 [shape = 'u8[208896]{0}', space=vmem, size = 0x33000, scoped, tag = 'input window, operand 1, single buffered']
    #allocation6 [shape = 's32[1]{0}', space=sflag, size = 0x4, scoped, tag = 'scoped memory for tpu_custom_call.1']
    #allocation7 [shape = 'u8[4096]{0}', space=vmem, size = 0x1000, scoped, tag = 'output window, operand 0, single buffered']
    %7 = vsyncpa [#allocation3], 0
    %8 = vsyncpa [#allocation6], 0
    %9 = vsyncpa [#allocation4], 0
    // Predicated region
    $region2: #{tpu_custom_call.1} parent=1 // pred_check
      _
    $region3: #{tpu_custom_call.1} parent=1 // pred_check_branch
      %11 = sbr.rel (0) target = $region5
    $region4: #{tpu_custom_call.1} parent=1 // pred_region
      %s13 = ssub.s32 128, 128
      %14 = vsyncadd [#allocation3], %s13
      %s16 = sshll.u32 [#allocation2], 4
      %s17 = int_to_ptr.vmem [resolvable:$true] %s16
      %19 = dma.hbm_to_vmem [thread:$0]  %s0, 128, %s17, [#allocation3]
    $region5: #{tpu_custom_call.1} parent=1 // pred_fallthru
      _
    // Predicated region
    $region6: #{tpu_custom_call.1} parent=1 // pred_check
      _
    $region7: #{tpu_custom_call.1} parent=1 // pred_check_branch
      %21 = sbr.rel (0) target = $region9
    $region8: #{tpu_custom_call.1} parent=1 // pred_region
      %s23 = ssub.s32 6528, 6528
      %24 = vsyncadd [#allocation6], %s23
      %s25 = sshll.u32 [#allocation5], 4
      %s26 = int_to_ptr.vmem [resolvable:$true] %s25
      %31 = dma.hbm_to_vmem [thread:$0]  %s1, 6528, %s26, [#allocation6], 128, 128, 8
    $region9: #{tpu_custom_call.1} parent=1 // pred_fallthru
      _
    // Predicated region
    $region10: #{tpu_custom_call.1} parent=1 // pred_check
      _
    $region11: #{tpu_custom_call.1} parent=1 // pred_check_branch
      %33 = sbr.rel (0) target = $region13
    $region12: #{tpu_custom_call.1} parent=1 // pred_region
      %34 = dma.done [#allocation3], 128
    $region13: #{tpu_custom_call.1} parent=1 // pred_fallthru
      _
    // Predicated region
    $region14: #{tpu_custom_call.1} parent=1 // pred_check
      _
    $region15: #{tpu_custom_call.1} parent=1 // pred_check_branch
      %36 = sbr.rel (0) target = $region17
    $region16: #{tpu_custom_call.1} parent=1 // pred_region
      %37 = dma.done [#allocation6], 6528
    $region17: #{tpu_custom_call.1} parent=1 // pred_fallthru
      _
    %v38 = vld [vmem:[#allocation2] sm:$0xff]
    %v39 = vld [vmem:[#allocation5] sm:$0xff]
    %v40 = vld [vmem:[#allocation5 + $0x8] sm:$0xff]
    %v41 = vld [vmem:[#allocation5 + $0x10] sm:$0xff]
    %v42 = vld [vmem:[#allocation5 + $0x18] sm:$0xff]
    %v43 = vld [vmem:[#allocation5 + $0x20] sm:$0xff]
    %v44 = vld [vmem:[#allocation5 + $0x28] sm:$0xff]
    %v45 = vld [vmem:[#allocation5 + $0x30] sm:$0xff]
    %v46 = vld [vmem:[#allocation5 + $0x38] sm:$0xff]
    %v47 = vld [vmem:[#allocation5 + $0x40] sm:$0xff]
    %v48 = vld [vmem:[#allocation5 + $0x48] sm:$0xff]
    %v49 = vld [vmem:[#allocation5 + $0x50] sm:$0xff]
    %v50 = vld [vmem:[#allocation5 + $0x58] sm:$0xff]
    %v51 = vld [vmem:[#allocation5 + $0x60] sm:$0xff]
    %v52 = vld [vmem:[#allocation5 + $0x68] sm:$0xff]
    %v53 = vld [vmem:[#allocation5 + $0x70] sm:$0xff]
    %v54 = vld [vmem:[#allocation5 + $0x78] sm:$0xff]
    %v55 = vld [vmem:[#allocation5 + $0x80] sm:$0x1]
    %v56 = vlaneseq
    %v57 = vshrl.u32 %v56, 7
    %v58 = vsub.s32 0, %v57
    %v59 = vrot.slane %v55, %v58
    %60 = vmatprep.subr.mxu0 0.0
    %61 = vmatpush1.msra.mxu0 %v39
    %62 = vmatprep.subr.mxu0 0.0
    %63 = vmatpush1.msra.mxu0 %v40
    %64 = vmatprep.subr.mxu0 0.0
    %65 = vmatpush1.msra.mxu0 %v41
    %66 = vmatprep.subr.mxu0 0.0
    %67 = vmatpush1.msra.mxu0 %v42
    %68 = vmatprep.subr.mxu0 0.0
    %69 = vmatpush1.msra.mxu0 %v43
    %70 = vmatprep.subr.mxu0 0.0
    %71 = vmatpush1.msra.mxu0 %v44
    %72 = vmatprep.subr.mxu0 0.0
    %73 = vmatpush1.msra.mxu0 %v45
    %74 = vmatprep.subr.mxu0 0.0
    %75 = vmatpush1.msra.mxu0 %v46
    %76 = vmatprep.subr.mxu0 0.0
    %77 = vmatpush1.msra.mxu0 %v47
    %78 = vmatprep.subr.mxu0 0.0
    %79 = vmatpush1.msra.mxu0 %v48
    %80 = vmatprep.subr.mxu0 0.0
    %81 = vmatpush1.msra.mxu0 %v49
    %82 = vmatprep.subr.mxu0 0.0
    %83 = vmatpush1.msra.mxu0 %v50
    %84 = vmatprep.subr.mxu0 0.0
    %85 = vmatpush1.msra.mxu0 %v51
    %86 = vmatprep.subr.mxu0 0.0
    %87 = vmatpush1.msra.mxu0 %v52
    %88 = vmatprep.subr.mxu0 0.0
    %89 = vmatpush1.msra.mxu0 %v53
    %90 = vmatprep.subr.mxu0 0.0
    %91 = vmatpush1.msra.mxu0 %v54
    %92 = vmatprep.subr.mxu0 0.0
    %93 = vmatpush1.msra.mxu0 0.0
    %94 = vmatprep.subr.mxu0 0.0
    %95 = vmatpush1.msra.mxu0 0.0
    %96 = vmatprep.subr.mxu0 0.0
    %97 = vmatpush1.msra.mxu0 0.0
    %98 = vmatprep.subr.mxu0 0.0
    %99 = vmatpush1.msra.mxu0 0.0
    %100 = vmatprep.subr.mxu0 0.0
    %101 = vmatpush1.msra.mxu0 0.0
    %102 = vmatprep.subr.mxu0 0.0
    %103 = vmatpush1.msra.mxu0 0.0
    %104 = vmatprep.subr.mxu0 0.0
    %105 = vmatpush1.msra.mxu0 0.0
    %106 = vmatprep.subr.mxu0 0.0
    %107 = vmatpush1.msra.mxu0 0.0
    %108 = vmatprep.subr.mxu0 0.0
    %109 = vmatpush1.msra.mxu0 0.0
    %110 = vmatprep.subr.mxu0 0.0
    %111 = vmatpush1.msra.mxu0 0.0
    %112 = vmatprep.subr.mxu0 0.0
    %113 = vmatpush1.msra.mxu0 0.0
    %114 = vmatprep.subr.mxu0 0.0
    %115 = vmatpush1.msra.mxu0 0.0
    %116 = vmatprep.subr.mxu0 0.0
    %117 = vmatpush1.msra.mxu0 0.0
    %118 = vmatprep.subr.mxu0 0.0
    %119 = vmatpush1.msra.mxu0 0.0
    %120 = vmatprep.subr.mxu0 0.0
    %121 = vmatpush1.msra.mxu0 0.0
    %122 = vmatprep.subr.mxu0 0.0
    %123 = vmatpush1.msra.mxu0 0.0
    %124 = vmatprep.mubr.f32.mxu0 0.0
    %125 = vmatmul.mubr.f32.gmra.mrb[0].mxu0 %v38
    %v126 = vpop.f32.mrb[0].mxu0
    %v127 = vadd.f32 %v59, %v126
    %v128 = vpop.f32.mrb[0].mxu0
    %129 = vdwg.mxu0
    %v130 = vmax.f32 %v127, 0.0
    %v131 = vld [vmem:[#allocation5 + $0x88] sm:$0xff]
    %v132 = vld [vmem:[#allocation5 + $0x90] sm:$0xff]
    %v133 = vld [vmem:[#allocation5 + $0x98] sm:$0xff]
    %v134 = vld [vmem:[#allocation5 + $0xa0] sm:$0xff]
    %v135 = vld [vmem:[#allocation5 + $0xa8] sm:$0xff]
    %v136 = vld [vmem:[#allocation5 + $0xb0] sm:$0xff]
    %v137 = vld [vmem:[#allocation5 + $0xb8] sm:$0xff]
    %v138 = vld [vmem:[#allocation5 + $0xc0] sm:$0xff]
    %v139 = vld [vmem:[#allocation5 + $0xc8] sm:$0xff]
    %v140 = vld [vmem:[#allocation5 + $0xd0] sm:$0xff]
    %v141 = vld [vmem:[#allocation5 + $0xd8] sm:$0xff]
    %v142 = vld [vmem:[#allocation5 + $0xe0] sm:$0xff]
    %v143 = vld [vmem:[#allocation5 + $0xe8] sm:$0xff]
    %v144 = vld [vmem:[#allocation5 + $0xf0] sm:$0xff]
    %v145 = vld [vmem:[#allocation5 + $0xf8] sm:$0xff]
    %v146 = vld [vmem:[#allocation5 + $0x100] sm:$0xff]
    %v147 = vld [vmem:[#allocation5 + $0x108] sm:$0x1]
    %v148 = vlaneseq
    %v149 = vshrl.u32 %v148, 7
    %v150 = vsub.s32 0, %v149
    %v151 = vrot.slane %v147, %v150
    %152 = vmatprep.subr.mxu0 0.0
    %153 = vmatpush1.msra.mxu0 %v131
    %154 = vmatprep.subr.mxu0 0.0
    %155 = vmatpush1.msra.mxu0 %v132
    %156 = vmatprep.subr.mxu0 0.0
    %157 = vmatpush1.msra.mxu0 %v133
    %158 = vmatprep.subr.mxu0 0.0
    %159 = vmatpush1.msra.mxu0 %v134
    %160 = vmatprep.subr.mxu0 0.0
    %161 = vmatpush1.msra.mxu0 %v135
    %162 = vmatprep.subr.mxu0 0.0
    %163 = vmatpush1.msra.mxu0 %v136
    %164 = vmatprep.subr.mxu0 0.0
    %165 = vmatpush1.msra.mxu0 %v137
    %166 = vmatprep.subr.mxu0 0.0
    %167 = vmatpush1.msra.mxu0 %v138
    %168 = vmatprep.subr.mxu0 0.0
    %169 = vmatpush1.msra.mxu0 %v139
    %170 = vmatprep.subr.mxu0 0.0
    %171 = vmatpush1.msra.mxu0 %v140
    %172 = vmatprep.subr.mxu0 0.0
    %173 = vmatpush1.msra.mxu0 %v141
    %174 = vmatprep.subr.mxu0 0.0
    %175 = vmatpush1.msra.mxu0 %v142
    %176 = vmatprep.subr.mxu0 0.0
    %177 = vmatpush1.msra.mxu0 %v143
    %178 = vmatprep.subr.mxu0 0.0
    %179 = vmatpush1.msra.mxu0 %v144
    %180 = vmatprep.subr.mxu0 0.0
    %181 = vmatpush1.msra.mxu0 %v145
    %182 = vmatprep.subr.mxu0 0.0
    %183 = vmatpush1.msra.mxu0 %v146
    %184 = vmatprep.subr.mxu0 0.0
    %185 = vmatpush1.msra.mxu0 0.0
    %186 = vmatprep.subr.mxu0 0.0
    %187 = vmatpush1.msra.mxu0 0.0
    %188 = vmatprep.subr.mxu0 0.0
    %189 = vmatpush1.msra.mxu0 0.0
    %190 = vmatprep.subr.mxu0 0.0
    %191 = vmatpush1.msra.mxu0 0.0
    %192 = vmatprep.subr.mxu0 0.0
    %193 = vmatpush1.msra.mxu0 0.0
    %194 = vmatprep.subr.mxu0 0.0
    %195 = vmatpush1.msra.mxu0 0.0
    %196 = vmatprep.subr.mxu0 0.0
    %197 = vmatpush1.msra.mxu0 0.0
    %198 = vmatprep.subr.mxu0 0.0
    %199 = vmatpush1.msra.mxu0 0.0
    %200 = vmatprep.subr.mxu0 0.0
    %201 = vmatpush1.msra.mxu0 0.0
    %202 = vmatprep.subr.mxu0 0.0
    %203 = vmatpush1.msra.mxu0 0.0
    %204 = vmatprep.subr.mxu0 0.0
    %205 = vmatpush1.msra.mxu0 0.0
    %206 = vmatprep.subr.mxu0 0.0
    %207 = vmatpush1.msra.mxu0 0.0
    %208 = vmatprep.subr.mxu0 0.0
    %209 = vmatpush1.msra.mxu0 0.0
    %210 = vmatprep.subr.mxu0 0.0
    %211 = vmatpush1.msra.mxu0 0.0
    %212 = vmatprep.subr.mxu0 0.0
    %213 = vmatpush1.msra.mxu0 0.0
    %214 = vmatprep.subr.mxu0 0.0
    %215 = vmatpush1.msra.mxu0 0.0
    %216 = vmatprep.mubr.f32.mxu0 0.0
    %217 = vmatmul.mubr.f32.gmra.mrb[0].mxu0 %v130
    %v218 = vpop.f32.mrb[0].mxu0
    %v219 = vadd.f32 %v151, %v218
    %v220 = vpop.f32.mrb[0].mxu0
    %221 = vdwg.mxu0
    %v222 = vmax.f32 %v219, 0.0
    %v223 = vld [vmem:[#allocation5 + $0x110] sm:$0xff]
    %v224 = vld [vmem:[#allocation5 + $0x118] sm:$0xff]
    %v225 = vld [vmem:[#allocation5 + $0x120] sm:$0xff]
    %v226 = vld [vmem:[#allocation5 + $0x128] sm:$0xff]
    %v227 = vld [vmem:[#allocation5 + $0x130] sm:$0xff]
    %v228 = vld [vmem:[#allocation5 + $0x138] sm:$0xff]
    %v229 = vld [vmem:[#allocation5 + $0x140] sm:$0xff]
    %v230 = vld [vmem:[#allocation5 + $0x148] sm:$0xff]
    %v231 = vld [vmem:[#allocation5 + $0x150] sm:$0xff]
    %v232 = vld [vmem:[#allocation5 + $0x158] sm:$0xff]
    %v233 = vld [vmem:[#allocation5 + $0x160] sm:$0xff]
    %v234 = vld [vmem:[#allocation5 + $0x168] sm:$0xff]
    %v235 = vld [vmem:[#allocation5 + $0x170] sm:$0xff]
    %v236 = vld [vmem:[#allocation5 + $0x178] sm:$0xff]
    %v237 = vld [vmem:[#allocation5 + $0x180] sm:$0xff]
    %v238 = vld [vmem:[#allocation5 + $0x188] sm:$0xff]
    %v239 = vld [vmem:[#allocation5 + $0x190] sm:$0x1]
    %v240 = vlaneseq
    %v241 = vshrl.u32 %v240, 7
    %v242 = vsub.s32 0, %v241
    %v243 = vrot.slane %v239, %v242
    %244 = vmatprep.subr.mxu0 0.0
    %245 = vmatpush1.msra.mxu0 %v223
    %246 = vmatprep.subr.mxu0 0.0
    %247 = vmatpush1.msra.mxu0 %v224
    %248 = vmatprep.subr.mxu0 0.0
    %249 = vmatpush1.msra.mxu0 %v225
    %250 = vmatprep.subr.mxu0 0.0
    %251 = vmatpush1.msra.mxu0 %v226
    %252 = vmatprep.subr.mxu0 0.0
    %253 = vmatpush1.msra.mxu0 %v227
    %254 = vmatprep.subr.mxu0 0.0
    %255 = vmatpush1.msra.mxu0 %v228
    %256 = vmatprep.subr.mxu0 0.0
    %257 = vmatpush1.msra.mxu0 %v229
    %258 = vmatprep.subr.mxu0 0.0
    %259 = vmatpush1.msra.mxu0 %v230
    %260 = vmatprep.subr.mxu0 0.0
    %261 = vmatpush1.msra.mxu0 %v231
    %262 = vmatprep.subr.mxu0 0.0
    %263 = vmatpush1.msra.mxu0 %v232
    %264 = vmatprep.subr.mxu0 0.0
    %265 = vmatpush1.msra.mxu0 %v233
    %266 = vmatprep.subr.mxu0 0.0
    %267 = vmatpush1.msra.mxu0 %v234
    %268 = vmatprep.subr.mxu0 0.0
    %269 = vmatpush1.msra.mxu0 %v235
    %270 = vmatprep.subr.mxu0 0.0
    %271 = vmatpush1.msra.mxu0 %v236
    %272 = vmatprep.subr.mxu0 0.0
    %273 = vmatpush1.msra.mxu0 %v237
    %274 = vmatprep.subr.mxu0 0.0
    %275 = vmatpush1.msra.mxu0 %v238
    %276 = vmatprep.subr.mxu0 0.0
    %277 = vmatpush1.msra.mxu0 0.0
    %278 = vmatprep.subr.mxu0 0.0
    %279 = vmatpush1.msra.mxu0 0.0
    %280 = vmatprep.subr.mxu0 0.0
    %281 = vmatpush1.msra.mxu0 0.0
    %282 = vmatprep.subr.mxu0 0.0
    %283 = vmatpush1.msra.mxu0 0.0
    %284 = vmatprep.subr.mxu0 0.0
    %285 = vmatpush1.msra.mxu0 0.0
    %286 = vmatprep.subr.mxu0 0.0
    %287 = vmatpush1.msra.mxu0 0.0
    %288 = vmatprep.subr.mxu0 0.0
    %289 = vmatpush1.msra.mxu0 0.0
    %290 = vmatprep.subr.mxu0 0.0
    %291 = vmatpush1.msra.mxu0 0.0
    %292 = vmatprep.subr.mxu0 0.0
    %293 = vmatpush1.msra.mxu0 0.0
    %294 = vmatprep.subr.mxu0 0.0
    %295 = vmatpush1.msra.mxu0 0.0
    %296 = vmatprep.subr.mxu0 0.0
    %297 = vmatpush1.msra.mxu0 0.0
    %298 = vmatprep.subr.mxu0 0.0
    %299 = vmatpush1.msra.mxu0 0.0
    %300 = vmatprep.subr.mxu0 0.0
    %301 = vmatpush1.msra.mxu0 0.0
    %302 = vmatprep.subr.mxu0 0.0
    %303 = vmatpush1.msra.mxu0 0.0
    %304 = vmatprep.subr.mxu0 0.0
    %305 = vmatpush1.msra.mxu0 0.0
    %306 = vmatprep.subr.mxu0 0.0
    %307 = vmatpush1.msra.mxu0 0.0
    %308 = vmatprep.mubr.f32.mxu0 0.0
    %309 = vmatmul.mubr.f32.gmra.mrb[0].mxu0 %v222
    %v310 = vpop.f32.mrb[0].mxu0
    %v311 = vadd.f32 %v243, %v310
    %v312 = vpop.f32.mrb[0].mxu0
    %313 = vdwg.mxu0
    %314 = vst [vmem:[#allocation7] sm:$0xff] %v311
    // Predicated region
    $region18: #{tpu_custom_call.1} parent=1 // pred_check
      _
    $region19: #{tpu_custom_call.1} parent=1 // pred_check_branch
      %316 = sbr.rel (0) target = $region21
    $region20: #{tpu_custom_call.1} parent=1 // pred_region
      %s318 = ssub.s32 128, 128
      %319 = vsyncadd [#allocation4], %s318
      %s321 = sshll.u32 [#allocation7], 4
      %s322 = int_to_ptr.vmem [resolvable:$true] %s321
      %324 = dma.vmem_to_hbm [thread:$0]  %s322, 128, %s2, [#allocation4]
    $region21: #{tpu_custom_call.1} parent=1 // pred_fallthru
      _
    // Predicated region
    $region22: #{tpu_custom_call.1} parent=1 // pred_check
      _
    $region23: #{tpu_custom_call.1} parent=1 // pred_check_branch
      %326 = sbr.rel (0) target = $region25
    $region24: #{tpu_custom_call.1} parent=1 // pred_region
      %327 = dma.done [#allocation4], 128
    $region25: #{tpu_custom_call.1} parent=1 // pred_fallthru
      _
    %328 = vsyncpa [#allocation3], 1
    %329 = vsyncpa [#allocation6], 1
    %330 = vsyncpa [#allocation4], 1

</llo_original>
